<compile_context>
chip_gen: v7x
topology: tpu7x:2x2x1
jax: 0.10.0
libtpu: 0.0.40
codegen_flags: <defaults>
</compile_context>

<pallas_src>
import functools

import numpy as np
import jax
import jax.numpy as jnp
from jax import lax
from jax.experimental import pallas as pl
from jax.experimental.pallas import tpu as pltpu


def routea_kernel(x_ref, w1_ref, t1_ref, w3_ref, t2_ref, su_ref, sd_ref, o_ref,
                  *, wcout):
    # x_ref:  (N*H, W*Cin)       all images, lane-dense input
    # w1_ref: (W*Cin, W*Cout)    kron(I_W, w1*s1)  -- 1x1 conv + folded BN scale
    # t1_ref: (1, W*Cout)        tiled (b1*s1 + t1)
    # w3_ref: (3*W*Cout, W*Cout) 3x3 conv blocks [up | center | down] (BN folded)
    # t2_ref: (1, W*Cout)        tiled (b2*s2 + t2)
    # su_ref: (N*H, N*H)         block-diag row-shift: row i <- row i-1 (0 at image tops)
    # sd_ref: (N*H, N*H)         block-diag row-shift: row i <- row i+1 (0 at image bottoms)
    # o_ref:  (N*H, W*Cout)      lane-dense output (last dim = 128)
    x = x_ref[...]                                                  # (NH, WCin)

    # ---- stage 1: 1x1 conv (+ folded BN) + ReLU, stays lane-dense ----
    y1 = jnp.dot(x, w1_ref[...], preferred_element_type=jnp.float32)
    y1 = jnp.maximum(y1 + t1_ref[...], 0.0)                         # (NH, WCout)

    # ---- stage 2: 3x3 conv (pad=1) as three aligned K=WCout MXU dots ----
    # Vertical (dy) taps via block-diagonal shift matrices: no sublane-unaligned
    # slices, no relayout copies, and image seams get the zero padding for free.
    up = jnp.dot(su_ref[...], y1, preferred_element_type=jnp.float32)    # y1[h-1]
    down = jnp.dot(sd_ref[...], y1, preferred_element_type=jnp.float32)  # y1[h+1]

    y2 = jnp.dot(up, w3_ref[0:wcout, :], preferred_element_type=jnp.float32)
    y2 = y2 + jnp.dot(y1, w3_ref[wcout:2 * wcout, :],
                      preferred_element_type=jnp.float32)
    y2 = y2 + jnp.dot(down, w3_ref[2 * wcout:3 * wcout, :],
                      preferred_element_type=jnp.float32)
    y2 = jnp.maximum(y2 + t2_ref[...], 0.0)                          # (NH, WCout)
    o_ref[...] = y2.astype(o_ref.dtype)


def route_a_pallas(x_nhwc, packed):
    N, H, W, Cin = x_nhwc.shape
    WCin = W * Cin
    WCout = packed["w1_big"].shape[1]
    Cout = WCout // W
    NH = N * H
    x_dense = x_nhwc.reshape(NH, WCin)                               # lane-dense input

    flops = (2 * NH * WCin * WCout          # stage-1 matmul
             + 2 * (2 * NH * NH * WCout)    # up/down row-shift matmuls
             + 3 * 2 * NH * WCout * WCout)  # stage-2 three K=WCout dots
    bytes_accessed = 4 * (NH * WCin + WCin * WCout + WCout
                          + 3 * WCout * WCout + WCout
                          + 2 * NH * NH + NH * WCout)

    kernel = functools.partial(routea_kernel, wcout=WCout)

    out_dense = pl.pallas_call(
        kernel,
        out_shape=jax.ShapeDtypeStruct((NH, WCout), jnp.float32),
        grid=(1,),
        in_specs=[
            pl.BlockSpec((NH, WCin), lambda i: (0, 0)),
            pl.BlockSpec((WCin, WCout), lambda i: (0, 0)),
            pl.BlockSpec((1, WCout), lambda i: (0, 0)),
            pl.BlockSpec((3 * WCout, WCout), lambda i: (0, 0)),
            pl.BlockSpec((1, WCout), lambda i: (0, 0)),
            pl.BlockSpec((NH, NH), lambda i: (0, 0)),
            pl.BlockSpec((NH, NH), lambda i: (0, 0)),
        ],
        out_specs=pl.BlockSpec((NH, WCout), lambda i: (0, 0)),
        compiler_params=pltpu.CompilerParams(dimension_semantics=("arbitrary",)),
        cost_estimate=pl.CostEstimate(flops=flops, transcendentals=0,
                                      bytes_accessed=bytes_accessed),
    )(x_dense, packed["w1_big"], packed["t1_dense"],
      packed["w3_big"], packed["t2_dense"], packed["s_up"], packed["s_down"])

    return out_dense.reshape(N, H, W, Cout)


def make_params(key, in_channel, out_channel, eps=1e-5):
    ks = jax.random.split(key, 12)
    w1_hwio = jax.random.normal(ks[0], (1, 1, in_channel, out_channel), jnp.float32) * 0.2
    b1 = jax.random.normal(ks[1], (out_channel,), jnp.float32) * 0.1
    w3_hwio = jax.random.normal(ks[2], (3, 3, out_channel, out_channel), jnp.float32) * 0.1
    b2 = jax.random.normal(ks[3], (out_channel,), jnp.float32) * 0.1
    # BatchNorm (eval mode): gamma, beta, running_mean, running_var.
    g1 = jax.random.uniform(ks[4], (out_channel,), jnp.float32, 0.5, 1.5)
    be1 = jax.random.normal(ks[5], (out_channel,), jnp.float32) * 0.1
    rm1 = jax.random.normal(ks[6], (out_channel,), jnp.float32) * 0.1
    rv1 = jax.random.uniform(ks[7], (out_channel,), jnp.float32, 0.5, 1.5)
    g2 = jax.random.uniform(ks[8], (out_channel,), jnp.float32, 0.5, 1.5)
    be2 = jax.random.normal(ks[9], (out_channel,), jnp.float32) * 0.1
    rm2 = jax.random.normal(ks[10], (out_channel,), jnp.float32) * 0.1
    rv2 = jax.random.uniform(ks[11], (out_channel,), jnp.float32, 0.5, 1.5)
    s1 = g1 / jnp.sqrt(rv1 + eps)
    t1 = be1 - rm1 * s1
    s2 = g2 / jnp.sqrt(rv2 + eps)
    t2 = be2 - rm2 * s2
    return {"w1_hwio": w1_hwio, "w3_hwio": w3_hwio,
            "b1": b1, "b2": b2, "s1": s1, "t1": t1, "s2": s2, "t2": t2}


def pack_params(p, N, H, W):
    """Fold BN into the conv weights/shifts and pre-pack the block-structured
    matmul operands + row-shift matrices for the lane-dense single-step kernel."""
    s1, t1, s2, t2 = p["s1"], p["t1"], p["s2"], p["t2"]
    w1f = p["w1_hwio"][0, 0] * s1[None, :]             # (Cin, Cout), BN scale folded
    w3f = p["w3_hwio"] * s2[None, None, None, :]       # (3, 3, Cout, Cout)
    sh1 = p["b1"] * s1 + t1                            # folded bias + BN shift
    sh2 = p["b2"] * s2 + t2
    Cout = w3f.shape[3]

    # Stage 1: y1_dense = x_dense @ kron(I_W, w1f)   -> (W*Cin, W*Cout)
    w1_big = jnp.kron(jnp.eye(W, dtype=jnp.float32), w1f)

    # Stage 2: for each kh (= dy tap) sum over kw of kron(shift(I_W), w3f); the
    # shifted identity realizes the dx offset AND the horizontal zero padding.
    # Sections stacked along K in (up, center, down) order.
    sections = []
    for kh in range(3):                                # dy = kh - 1
        sec = jnp.zeros((W * Cout, W * Cout), jnp.float32)
        for kw in range(3):                            # dx = kw - 1
            shift_eye = jnp.eye(W, k=-(kw - 1), dtype=jnp.float32)
            sec = sec + jnp.kron(shift_eye, w3f[kh, kw])
        sections.append(sec)
    w3_big = jnp.concatenate(sections, axis=0)         # (3*W*Cout, W*Cout)

    # Vertical-tap row-shift matrices over the folded (N*H) row axis.
    # s_up[i, i-1] = 1 within each image (zero rows at image tops -> padding);
    # s_down[i, i+1] = 1 within each image (zero rows at image bottoms).
    eye_n = jnp.eye(N, dtype=jnp.float32)
    s_up = jnp.kron(eye_n, jnp.eye(H, k=-1, dtype=jnp.float32))
    s_down = jnp.kron(eye_n, jnp.eye(H, k=1, dtype=jnp.float32))

    return {"w1_big": w1_big, "w3_big": w3_big,
            "t1_dense": jnp.tile(sh1, W)[None, :],     # (1, W*Cout)
            "t2_dense": jnp.tile(sh2, W)[None, :],
            "s_up": s_up, "s_down": s_down}


def route_a_reference(x_nhwc, p):
    dn = ("NHWC", "HWIO", "NHWC")
    y = lax.conv_general_dilated(x_nhwc, p["w1_hwio"], (1, 1), "VALID",
                                 dimension_numbers=dn) + p["b1"]
    y = jnp.maximum(y * p["s1"] + p["t1"], 0.0)
    y = lax.conv_general_dilated(y, p["w3_hwio"], (1, 1), ((1, 1), (1, 1)),
                                 dimension_numbers=dn) + p["b2"]
    y = jnp.maximum(y * p["s2"] + p["t2"], 0.0)
    return y


if __name__ == "__main__":
    # Small shapes consistent with the module: N=2, in_channel=4, out_channel=8, 16x16.
    N, Cin, Cout, H, W = 2, 4, 8, 16, 16
    key = jax.random.PRNGKey(0)
    kx, kp = jax.random.split(key)
    x_nchw = jax.random.normal(kx, (N, Cin, H, W), jnp.float32)   # PyTorch-style input
    x_nhwc = jnp.transpose(x_nchw, (0, 2, 3, 1))                  # kernel layout

    raw = make_params(kp, Cin, Cout)
    packed = pack_params(raw, N, H, W)

    out = jax.block_until_ready(route_a_pallas(x_nhwc, packed))

    # Sanity check against a plain-JAX reference (inference-mode BN).
    ref = jax.block_until_ready(route_a_reference(x_nhwc, raw))
    np.testing.assert_allclose(np.asarray(out), np.asarray(ref), rtol=1e-4, atol=1e-4)

    print("KERNEL_OK")
</pallas_src>

<mosaic_0001>
module attributes {stable_mosaic.version = 11 : i64} {
  func.func @routea_kernel(%arg0: i32, %arg1: memref<32x64xf32, #tpu.memory_space<vmem>>, %arg2: memref<64x128xf32, #tpu.memory_space<vmem>>, %arg3: memref<1x128xf32, #tpu.memory_space<vmem>>, %arg4: memref<384x128xf32, #tpu.memory_space<vmem>>, %arg5: memref<1x128xf32, #tpu.memory_space<vmem>>, %arg6: memref<32x32xf32, #tpu.memory_space<vmem>>, %arg7: memref<32x32xf32, #tpu.memory_space<vmem>>, %arg8: memref<32x128xf32, #tpu.memory_space<vmem>>) attributes {dimension_semantics = [#tpu.dimension_semantics<arbitrary>], iteration_bounds = array<i64: 1>, scalar_prefetch = 0 : i64, scratch_operands = 0 : i64, tpu.core_type = #tpu.core_type<tc>, window_params = [{pipeline_mode = #tpu.pipeline_mode<synchronous>, transform_indices = @transform_0, window_bounds = array<i64: 32, 64>}, {pipeline_mode = #tpu.pipeline_mode<synchronous>, transform_indices = @transform_1, window_bounds = array<i64: 64, 128>}, {pipeline_mode = #tpu.pipeline_mode<synchronous>, transform_indices = @transform_2, window_bounds = array<i64: 1, 128>}, {pipeline_mode = #tpu.pipeline_mode<synchronous>, transform_indices = @transform_3, window_bounds = array<i64: 384, 128>}, {pipeline_mode = #tpu.pipeline_mode<synchronous>, transform_indices = @transform_4, window_bounds = array<i64: 1, 128>}, {pipeline_mode = #tpu.pipeline_mode<synchronous>, transform_indices = @transform_5, window_bounds = array<i64: 32, 32>}, {pipeline_mode = #tpu.pipeline_mode<synchronous>, transform_indices = @transform_6, window_bounds = array<i64: 32, 32>}, {pipeline_mode = #tpu.pipeline_mode<synchronous>, transform_indices = @transform_7, window_bounds = array<i64: 32, 128>}]} {
    %c0 = arith.constant 0 : index
    %c0_0 = arith.constant 0 : index
    %0 = vector.load %arg1[%c0, %c0_0] : memref<32x64xf32, #tpu.memory_space<vmem>>, vector<32x64xf32>
    %c0_1 = arith.constant 0 : index
    %c0_2 = arith.constant 0 : index
    %1 = vector.load %arg2[%c0_1, %c0_2] : memref<64x128xf32, #tpu.memory_space<vmem>>, vector<64x128xf32>
    %cst = arith.constant dense<0.000000e+00> : vector<32x128xf32>
    %2 = tpu.matmul %0, %1, %cst {dimension_numbers = #tpu.dot_dimension_numbers<[1], [0], [0], [1], [0, 0, 1, 1], [], []>} : vector<32x64xf32>, vector<64x128xf32>, vector<32x128xf32> -> vector<32x128xf32>
    %c0_3 = arith.constant 0 : index
    %c0_4 = arith.constant 0 : index
    %3 = vector.load %arg3[%c0_3, %c0_4] : memref<1x128xf32, #tpu.memory_space<vmem>>, vector<1x128xf32>
    %4 = vector.broadcast %3 : vector<1x128xf32> to vector<32x128xf32>
    %5 = arith.addf %2, %4 : vector<32x128xf32>
    %cst_5 = arith.constant 0.000000e+00 : f32
    %6 = vector.broadcast %cst_5 : f32 to vector<32x128xf32>
    %7 = arith.maximumf %5, %6 : vector<32x128xf32>
    %c0_6 = arith.constant 0 : index
    %c0_7 = arith.constant 0 : index
    %8 = vector.load %arg6[%c0_6, %c0_7] : memref<32x32xf32, #tpu.memory_space<vmem>>, vector<32x32xf32>
    %cst_8 = arith.constant dense<0.000000e+00> : vector<32x128xf32>
    %9 = tpu.matmul %8, %7, %cst_8 {dimension_numbers = #tpu.dot_dimension_numbers<[1], [0], [0], [1], [0, 0, 1, 1], [], []>} : vector<32x32xf32>, vector<32x128xf32>, vector<32x128xf32> -> vector<32x128xf32>
    %c0_9 = arith.constant 0 : index
    %c0_10 = arith.constant 0 : index
    %10 = vector.load %arg7[%c0_9, %c0_10] : memref<32x32xf32, #tpu.memory_space<vmem>>, vector<32x32xf32>
    %cst_11 = arith.constant dense<0.000000e+00> : vector<32x128xf32>
    %11 = tpu.matmul %10, %7, %cst_11 {dimension_numbers = #tpu.dot_dimension_numbers<[1], [0], [0], [1], [0, 0, 1, 1], [], []>} : vector<32x32xf32>, vector<32x128xf32>, vector<32x128xf32> -> vector<32x128xf32>
    %c0_12 = arith.constant 0 : index
    %c0_13 = arith.constant 0 : index
    %12 = vector.load %arg4[%c0_12, %c0_13] : memref<384x128xf32, #tpu.memory_space<vmem>>, vector<128x128xf32>
    %cst_14 = arith.constant dense<0.000000e+00> : vector<32x128xf32>
    %13 = tpu.matmul %9, %12, %cst_14 {dimension_numbers = #tpu.dot_dimension_numbers<[1], [0], [0], [1], [0, 0, 1, 1], [], []>} : vector<32x128xf32>, vector<128x128xf32>, vector<32x128xf32> -> vector<32x128xf32>
    %c128 = arith.constant 128 : index
    %c0_15 = arith.constant 0 : index
    %14 = vector.load %arg4[%c128, %c0_15] : memref<384x128xf32, #tpu.memory_space<vmem>>, vector<128x128xf32>
    %cst_16 = arith.constant dense<0.000000e+00> : vector<32x128xf32>
    %15 = tpu.matmul %7, %14, %cst_16 {dimension_numbers = #tpu.dot_dimension_numbers<[1], [0], [0], [1], [0, 0, 1, 1], [], []>} : vector<32x128xf32>, vector<128x128xf32>, vector<32x128xf32> -> vector<32x128xf32>
    %16 = arith.addf %13, %15 : vector<32x128xf32>
    %c256 = arith.constant 256 : index
    %c0_17 = arith.constant 0 : index
    %17 = vector.load %arg4[%c256, %c0_17] : memref<384x128xf32, #tpu.memory_space<vmem>>, vector<128x128xf32>
    %cst_18 = arith.constant dense<0.000000e+00> : vector<32x128xf32>
    %18 = tpu.matmul %11, %17, %cst_18 {dimension_numbers = #tpu.dot_dimension_numbers<[1], [0], [0], [1], [0, 0, 1, 1], [], []>} : vector<32x128xf32>, vector<128x128xf32>, vector<32x128xf32> -> vector<32x128xf32>
    %19 = arith.addf %16, %18 : vector<32x128xf32>
    %c0_19 = arith.constant 0 : index
    %c0_20 = arith.constant 0 : index
    %20 = vector.load %arg5[%c0_19, %c0_20] : memref<1x128xf32, #tpu.memory_space<vmem>>, vector<1x128xf32>
    %21 = vector.broadcast %20 : vector<1x128xf32> to vector<32x128xf32>
    %22 = arith.addf %19, %21 : vector<32x128xf32>
    %cst_21 = arith.constant 0.000000e+00 : f32
    %23 = vector.broadcast %cst_21 : f32 to vector<32x128xf32>
    %24 = arith.maximumf %22, %23 : vector<32x128xf32>
    %c0_22 = arith.constant 0 : index
    %c0_23 = arith.constant 0 : index
    %25 = vector.load %arg8[%c0_22, %c0_23] : memref<32x128xf32, #tpu.memory_space<vmem>>, vector<32x128xf32>
    tpu.vector_store %arg8[%c0_22, %c0_23], %24 {strides = array<i32>} : memref<32x128xf32, #tpu.memory_space<vmem>>, vector<32x128xf32>,
    return
  }
  func.func @transform_0(%arg0: i32) -> (i32, i32) {
    %c0_i32 = arith.constant 0 : i32
    %c0_i32_0 = arith.constant 0 : i32
    %c0_i32_1 = arith.constant 0 : i32
    return %c0_i32, %c0_i32_0 : i32, i32
  }
  func.func @transform_1(%arg0: i32) -> (i32, i32) {
    %c0_i32 = arith.constant 0 : i32
    %c0_i32_0 = arith.constant 0 : i32
    %c0_i32_1 = arith.constant 0 : i32
    return %c0_i32, %c0_i32_0 : i32, i32
  }
  func.func @transform_2(%arg0: i32) -> (i32, i32) {
    %c0_i32 = arith.constant 0 : i32
    %c0_i32_0 = arith.constant 0 : i32
    %c0_i32_1 = arith.constant 0 : i32
    return %c0_i32, %c0_i32_0 : i32, i32
  }
  func.func @transform_3(%arg0: i32) -> (i32, i32) {
    %c0_i32 = arith.constant 0 : i32
    %c0_i32_0 = arith.constant 0 : i32
    %c0_i32_1 = arith.constant 0 : i32
    return %c0_i32, %c0_i32_0 : i32, i32
  }
  func.func @transform_4(%arg0: i32) -> (i32, i32) {
    %c0_i32 = arith.constant 0 : i32
    %c0_i32_0 = arith.constant 0 : i32
    %c0_i32_1 = arith.constant 0 : i32
    return %c0_i32, %c0_i32_0 : i32, i32
  }
  func.func @transform_5(%arg0: i32) -> (i32, i32) {
    %c0_i32 = arith.constant 0 : i32
    %c0_i32_0 = arith.constant 0 : i32
    %c0_i32_1 = arith.constant 0 : i32
    return %c0_i32, %c0_i32_0 : i32, i32
  }
  func.func @transform_6(%arg0: i32) -> (i32, i32) {
    %c0_i32 = arith.constant 0 : i32
    %c0_i32_0 = arith.constant 0 : i32
    %c0_i32_1 = arith.constant 0 : i32
    return %c0_i32, %c0_i32_0 : i32, i32
  }
  func.func @transform_7(%arg0: i32) -> (i32, i32) {
    %c0_i32 = arith.constant 0 : i32
    %c0_i32_0 = arith.constant 0 : i32
    %c0_i32_1 = arith.constant 0 : i32
    return %c0_i32, %c0_i32_0 : i32, i32
  }
}

</mosaic_0001>

<llo_original>
// kernel: tpu_custom_call.1
$region0: #{tpu_custom_call.1}
  #allocation0 [shape = 'u32[]', space=smem, size = 0x4, offset = 0x4, fixed_abs, tag = 'smem constant byte address 0x4 - core index']
  #allocation1 [shape = 'u32[144,128]{1,0:T(1,128)}', space=vmem, size = 0x12000, scoped, tag = 'internal scratch']
  %s0 = inlined_call_operand.hbm [shape: f32[32,64], index: 0, kind: input, shape index: {}]
  %s1 = inlined_call_operand.hbm [shape: f32[64,128], index: 1, kind: input, shape index: {}]
  %s2 = inlined_call_operand.vmem [shape: f32[1,128], index: 2, kind: input, shape index: {}]
  %s3 = inlined_call_operand.hbm [shape: f32[384,128], index: 3, kind: input, shape index: {}]
  %s4 = inlined_call_operand.vmem [shape: f32[1,128], index: 4, kind: input, shape index: {}]
  %s5 = inlined_call_operand.hbm [shape: f32[32,32], index: 5, kind: input, shape index: {}]
  %s6 = inlined_call_operand.hbm [shape: f32[32,32], index: 6, kind: input, shape index: {}]
  %s7 = inlined_call_operand.hbm [shape: f32[32,128], index: 7, kind: output, shape index: {}]
  %s8 = sld [smem:[#allocation0]]
  $region58: #{tpu_custom_call.1} parent=0
    _
  %s10 = ssub.s32 1, %s8
  %s11 = scalar_select 0, %s10, %s8
  $region1: #{tpu_custom_call.1} parent=0
    #allocation2 [shape = 'u8[16384]{0}', space=vmem, size = 0x4000, scoped, tag = 'input window, operand 0, single buffered']
    #allocation3 [shape = 's32[1]{0}', space=sflag, size = 0x4, scoped, tag = 'scoped memory for tpu_custom_call.1']
    #allocation4 [shape = 's32[1]{0}', space=sflag, size = 0x4, scoped, tag = 'scoped memory for tpu_custom_call.1']
    #allocation5 [shape = 'u8[32768]{0}', space=vmem, size = 0x8000, scoped, tag = 'input window, operand 1, single buffered']
    #allocation6 [shape = 's32[1]{0}', space=sflag, size = 0x4, scoped, tag = 'scoped memory for tpu_custom_call.1']
    #allocation7 [shape = 'u8[196608]{0}', space=vmem, size = 0x30000, scoped, tag = 'input window, operand 3, single buffered']
    #allocation8 [shape = 'u8[16384]{0}', space=vmem, size = 0x4000, scoped, tag = 'input window, operand 5, single buffered']
    #allocation9 [shape = 's32[1]{0}', space=sflag, size = 0x4, scoped, tag = 'scoped memory for tpu_custom_call.1']
    #allocation10 [shape = 'u8[16384]{0}', space=vmem, size = 0x4000, scoped, tag = 'input window, operand 6, single buffered']
    #allocation11 [shape = 'u8[16384]{0}', space=vmem, size = 0x4000, scoped, tag = 'output window, operand 0, single buffered']
    %12 = vsyncpa [#allocation3], 0
    %13 = vsyncpa [#allocation6], 0
    %14 = vsyncpa [#allocation9], 0
    %15 = vsyncpa [#allocation4], 0
    // Predicated region
    $region2: #{tpu_custom_call.1} parent=1 // pred_check
      _
    $region3: #{tpu_custom_call.1} parent=1 // pred_check_branch
      %17 = sbr.rel (0) target = $region5
    $region4: #{tpu_custom_call.1} parent=1 // pred_region
      %s19 = ssub.s32 512, 512
      %20 = vsyncadd [#allocation3], %s19
      %s21 = sshll.u32 [#allocation2], 4
      %s22 = int_to_ptr.vmem [resolvable:$true] %s21
      %27 = dma.hbm_to_vmem [thread:$0]  %s0, 512, %s22, [#allocation3], 128, 128, 8
    $region5: #{tpu_custom_call.1} parent=1 // pred_fallthru
      _
    // Predicated region
    $region6: #{tpu_custom_call.1} parent=1 // pred_check
      _
    $region7: #{tpu_custom_call.1} parent=1 // pred_check_branch
      %29 = sbr.rel (0) target = $region9
    $region8: #{tpu_custom_call.1} parent=1 // pred_region
      %s31 = ssub.s32 1024, 1024
      %32 = vsyncadd [#allocation6], %s31
      %s33 = sshll.u32 [#allocation5], 4
      %s34 = int_to_ptr.vmem [resolvable:$true] %s33
      %39 = dma.hbm_to_vmem [thread:$0]  %s1, 1024, %s34, [#allocation6], 128, 128, 8
    $region9: #{tpu_custom_call.1} parent=1 // pred_fallthru
      _
    // Predicated region
    $region10: #{tpu_custom_call.1} parent=1 // pred_check
      _
    $region11: #{tpu_custom_call.1} parent=1 // pred_check_branch
      %41 = sbr.rel (0) target = $region13
    $region12: #{tpu_custom_call.1} parent=1 // pred_region
      _
    $region13: #{tpu_custom_call.1} parent=1 // pred_fallthru
      _
    // Predicated region
    $region14: #{tpu_custom_call.1} parent=1 // pred_check
      _
    $region15: #{tpu_custom_call.1} parent=1 // pred_check_branch
      %43 = sbr.rel (0) target = $region17
    $region16: #{tpu_custom_call.1} parent=1 // pred_region
      %s45 = ssub.s32 6144, 6144
      %46 = vsyncadd [#allocation6], %s45
      %s47 = sshll.u32 [#allocation7], 4
      %s48 = int_to_ptr.vmem [resolvable:$true] %s47
      %53 = dma.hbm_to_vmem [thread:$0]  %s3, 6144, %s48, [#allocation6], 128, 128, 8
    $region17: #{tpu_custom_call.1} parent=1 // pred_fallthru
      _
    // Predicated region
    $region18: #{tpu_custom_call.1} parent=1 // pred_check
      _
    $region19: #{tpu_custom_call.1} parent=1 // pred_check_branch
      %55 = sbr.rel (0) target = $region21
    $region20: #{tpu_custom_call.1} parent=1 // pred_region
      _
    $region21: #{tpu_custom_call.1} parent=1 // pred_fallthru
      _
    // Predicated region
    $region22: #{tpu_custom_call.1} parent=1 // pred_check
      _
    $region23: #{tpu_custom_call.1} parent=1 // pred_check_branch
      %57 = sbr.rel (0) target = $region25
    $region24: #{tpu_custom_call.1} parent=1 // pred_region
      %s59 = ssub.s32 512, 512
      %60 = vsyncadd [#allocation9], %s59
      %s61 = sshll.u32 [#allocation8], 4
      %s62 = int_to_ptr.vmem [resolvable:$true] %s61
      %67 = dma.hbm_to_vmem [thread:$0]  %s5, 512, %s62, [#allocation9], 128, 128, 8
    $region25: #{tpu_custom_call.1} parent=1 // pred_fallthru
      _
    // Predicated region
    $region26: #{tpu_custom_call.1} parent=1 // pred_check
      _
    $region27: #{tpu_custom_call.1} parent=1 // pred_check_branch
      %69 = sbr.rel (0) target = $region29
    $region28: #{tpu_custom_call.1} parent=1 // pred_region
      %s71 = ssub.s32 512, 512
      %72 = vsyncadd [#allocation9], %s71
      %s73 = sshll.u32 [#allocation10], 4
      %s74 = int_to_ptr.vmem [resolvable:$true] %s73
      %79 = dma.hbm_to_vmem [thread:$0]  %s6, 512, %s74, [#allocation9], 128, 128, 8
    $region29: #{tpu_custom_call.1} parent=1 // pred_fallthru
      _
    // Predicated region
    $region30: #{tpu_custom_call.1} parent=1 // pred_check
      _
    $region31: #{tpu_custom_call.1} parent=1 // pred_check_branch
      %81 = sbr.rel (0) target = $region33
    $region32: #{tpu_custom_call.1} parent=1 // pred_region
      %82 = dma.done [#allocation3], 512
    $region33: #{tpu_custom_call.1} parent=1 // pred_fallthru
      _
    // Predicated region
    $region34: #{tpu_custom_call.1} parent=1 // pred_check
      _
    $region35: #{tpu_custom_call.1} parent=1 // pred_check_branch
      %84 = sbr.rel (0) target = $region37
    $region36: #{tpu_custom_call.1} parent=1 // pred_region
      %85 = dma.done [#allocation6], 1024
    $region37: #{tpu_custom_call.1} parent=1 // pred_fallthru
      _
    // Predicated region
    $region38: #{tpu_custom_call.1} parent=1 // pred_check
      _
    $region39: #{tpu_custom_call.1} parent=1 // pred_check_branch
      %87 = sbr.rel (0) target = $region41
    $region40: #{tpu_custom_call.1} parent=1 // pred_region
      %88 = dma.done [#allocation6], 6144
    $region41: #{tpu_custom_call.1} parent=1 // pred_fallthru
      _
    // Predicated region
    $region42: #{tpu_custom_call.1} parent=1 // pred_check
      _
    $region43: #{tpu_custom_call.1} parent=1 // pred_check_branch
      %90 = sbr.rel (0) target = $region45
    $region44: #{tpu_custom_call.1} parent=1 // pred_region
      %91 = dma.done [#allocation9], 512
    $region45: #{tpu_custom_call.1} parent=1 // pred_fallthru
      _
    // Predicated region
    $region46: #{tpu_custom_call.1} parent=1 // pred_check
      _
    $region47: #{tpu_custom_call.1} parent=1 // pred_check_branch
      %93 = sbr.rel (0) target = $region49
    $region48: #{tpu_custom_call.1} parent=1 // pred_region
      %94 = dma.done [#allocation9], 512
    $region49: #{tpu_custom_call.1} parent=1 // pred_fallthru
      _
    %v95 = vld [vmem:[#allocation2] sm:$0xff]
    %v96 = vld [vmem:[#allocation2 + $0x8] sm:$0xff]
    %v97 = vld [vmem:[#allocation2 + $0x10] sm:$0xff]
    %v98 = vld [vmem:[#allocation2 + $0x18] sm:$0xff]
    %v99 = vld [vmem:[#allocation5] sm:$0xff]
    %v100 = vld [vmem:[#allocation5 + $0x8] sm:$0xff]
    %v101 = vld [vmem:[#allocation5 + $0x10] sm:$0xff]
    %v102 = vld [vmem:[#allocation5 + $0x18] sm:$0xff]
    %v103 = vld [vmem:[#allocation5 + $0x20] sm:$0xff]
    %v104 = vld [vmem:[#allocation5 + $0x28] sm:$0xff]
    %v105 = vld [vmem:[#allocation5 + $0x30] sm:$0xff]
    %v106 = vld [vmem:[#allocation5 + $0x38] sm:$0xff]
    %v107 = vld [vmem:[%s2] sm:$0x1]
    %v109 = vlaneseq
    %v110 = vshrl.u32 %v109, 7
    %v111 = vsub.s32 0, %v110
    %v112 = vrot.slane %v107, %v111
    %vm114 = vcmask 523264
    %v116 = vsel %vm114, %v95, 0
    %v119 = vsel %vm114, %v96, 0
    %v122 = vsel %vm114, %v97, 0
    %v125 = vsel %vm114, %v98, 0
    %127 = vmatprep.subr.mxu0 0.0
    %128 = vmatpush1.msra.mxu0 %v99
    %129 = vmatprep.subr.mxu0 0.0
    %130 = vmatpush1.msra.mxu0 %v100
    %131 = vmatprep.subr.mxu0 0.0
    %132 = vmatpush1.msra.mxu0 %v101
    %133 = vmatprep.subr.mxu0 0.0
    %134 = vmatpush1.msra.mxu0 %v102
    %135 = vmatprep.subr.mxu0 0.0
    %136 = vmatpush1.msra.mxu0 %v103
    %137 = vmatprep.subr.mxu0 0.0
    %138 = vmatpush1.msra.mxu0 %v104
    %139 = vmatprep.subr.mxu0 0.0
    %140 = vmatpush1.msra.mxu0 %v105
    %141 = vmatprep.subr.mxu0 0.0
    %142 = vmatpush1.msra.mxu0 %v106
    %143 = vmatprep.subr.mxu0 0.0
    %144 = vmatpush1.msra.mxu0 0.0
    %145 = vmatprep.subr.mxu0 0.0
    %146 = vmatpush1.msra.mxu0 0.0
    %147 = vmatprep.subr.mxu0 0.0
    %148 = vmatpush1.msra.mxu0 0.0
    %149 = vmatprep.subr.mxu0 0.0
    %150 = vmatpush1.msra.mxu0 0.0
    %151 = vmatprep.subr.mxu0 0.0
    %152 = vmatpush1.msra.mxu0 0.0
    %153 = vmatprep.subr.mxu0 0.0
    %154 = vmatpush1.msra.mxu0 0.0
    %155 = vmatprep.subr.mxu0 0.0
    %156 = vmatpush1.msra.mxu0 0.0
    %157 = vmatprep.subr.mxu0 0.0
    %158 = vmatpush1.msra.mxu0 0.0
    %159 = vmatprep.subr.mxu0 0.0
    %160 = vmatpush1.msra.mxu0 0.0
    %161 = vmatprep.subr.mxu0 0.0
    %162 = vmatpush1.msra.mxu0 0.0
    %163 = vmatprep.subr.mxu0 0.0
    %164 = vmatpush1.msra.mxu0 0.0
    %165 = vmatprep.subr.mxu0 0.0
    %166 = vmatpush1.msra.mxu0 0.0
    %167 = vmatprep.subr.mxu0 0.0
    %168 = vmatpush1.msra.mxu0 0.0
    %169 = vmatprep.subr.mxu0 0.0
    %170 = vmatpush1.msra.mxu0 0.0
    %171 = vmatprep.subr.mxu0 0.0
    %172 = vmatpush1.msra.mxu0 0.0
    %173 = vmatprep.subr.mxu0 0.0
    %174 = vmatpush1.msra.mxu0 0.0
    %175 = vmatprep.subr.mxu0 0.0
    %176 = vmatpush1.msra.mxu0 0.0
    %177 = vmatprep.subr.mxu0 0.0
    %178 = vmatpush1.msra.mxu0 0.0
    %179 = vmatprep.subr.mxu0 0.0
    %180 = vmatpush1.msra.mxu0 0.0
    %181 = vmatprep.subr.mxu0 0.0
    %182 = vmatpush1.msra.mxu0 0.0
    %183 = vmatprep.subr.mxu0 0.0
    %184 = vmatpush1.msra.mxu0 0.0
    %185 = vmatprep.subr.mxu0 0.0
    %186 = vmatpush1.msra.mxu0 0.0
    %187 = vmatprep.subr.mxu0 0.0
    %188 = vmatpush1.msra.mxu0 0.0
    %189 = vmatprep.subr.mxu0 0.0
    %190 = vmatpush1.msra.mxu0 0.0
    %191 = vmatprep.mubr.f32.mxu0 0.0
    %192 = vmatmul.mubr.f32.gmra.mrb[0].mxu0 %v116
    %v193 = vpop.f32.mrb[0].mxu0
    %v194 = vadd.f32 %v112, %v193
    %v195 = vpop.f32.mrb[0].mxu0
    %196 = vmatprep.mubr.f32.mxu0 0.0
    %197 = vmatmul.mubr.f32.gmra.mrb[0].mxu0 %v119
    %v198 = vpop.f32.mrb[0].mxu0
    %v199 = vadd.f32 %v112, %v198
    %v200 = vpop.f32.mrb[0].mxu0
    %201 = vmatprep.mubr.f32.mxu0 0.0
    %202 = vmatmul.mubr.f32.gmra.mrb[0].mxu0 %v122
    %v203 = vpop.f32.mrb[0].mxu0
    %v204 = vadd.f32 %v112, %v203
    %v205 = vpop.f32.mrb[0].mxu0
    %206 = vmatprep.mubr.f32.mxu0 0.0
    %207 = vmatmul.mubr.f32.gmra.mrb[0].mxu0 %v125
    %v208 = vpop.f32.mrb[0].mxu0
    %v209 = vadd.f32 %v112, %v208
    %v210 = vpop.f32.mrb[0].mxu0
    %211 = vdwg.mxu0
    %v212 = vmax.f32 %v194, 0.0
    %v213 = vmax.f32 %v199, 0.0
    %v214 = vmax.f32 %v204, 0.0
    %v215 = vmax.f32 %v209, 0.0
    %v216 = vld [vmem:[#allocation8] sm:$0xff]
    %v217 = vld [vmem:[#allocation8 + $0x8] sm:$0xff]
    %v218 = vld [vmem:[#allocation8 + $0x10] sm:$0xff]
    %v219 = vld [vmem:[#allocation8 + $0x18] sm:$0xff]
    %vm220 = vcmask 261120
    %v222 = vsel %vm220, %v216, 0
    %v225 = vsel %vm220, %v217, 0
    %v228 = vsel %vm220, %v218, 0
    %v231 = vsel %vm220, %v219, 0
    %233 = vmatprep.subr.mxu0 0.0
    %234 = vmatpush1.msra.mxu0 %v212
    %235 = vmatprep.subr.mxu0 0.0
    %236 = vmatpush1.msra.mxu0 %v213
    %237 = vmatprep.subr.mxu0 0.0
    %238 = vmatpush1.msra.mxu0 %v214
    %239 = vmatprep.subr.mxu0 0.0
    %240 = vmatpush1.msra.mxu0 %v215
    %241 = vmatprep.subr.mxu0 0.0
    %242 = vmatpush1.msra.mxu0 0.0
    %243 = vmatprep.subr.mxu0 0.0
    %244 = vmatpush1.msra.mxu0 0.0
    %245 = vmatprep.subr.mxu0 0.0
    %246 = vmatpush1.msra.mxu0 0.0
    %247 = vmatprep.subr.mxu0 0.0
    %248 = vmatpush1.msra.mxu0 0.0
    %249 = vmatprep.subr.mxu0 0.0
    %250 = vmatpush1.msra.mxu0 0.0
    %251 = vmatprep.subr.mxu0 0.0
    %252 = vmatpush1.msra.mxu0 0.0
    %253 = vmatprep.subr.mxu0 0.0
    %254 = vmatpush1.msra.mxu0 0.0
    %255 = vmatprep.subr.mxu0 0.0
    %256 = vmatpush1.msra.mxu0 0.0
    %257 = vmatprep.subr.mxu0 0.0
    %258 = vmatpush1.msra.mxu0 0.0
    %259 = vmatprep.subr.mxu0 0.0
    %260 = vmatpush1.msra.mxu0 0.0
    %261 = vmatprep.subr.mxu0 0.0
    %262 = vmatpush1.msra.mxu0 0.0
    %263 = vmatprep.subr.mxu0 0.0
    %264 = vmatpush1.msra.mxu0 0.0
    %265 = vmatprep.subr.mxu0 0.0
    %266 = vmatpush1.msra.mxu0 0.0
    %267 = vmatprep.subr.mxu0 0.0
    %268 = vmatpush1.msra.mxu0 0.0
    %269 = vmatprep.subr.mxu0 0.0
    %270 = vmatpush1.msra.mxu0 0.0
    %271 = vmatprep.subr.mxu0 0.0
    %272 = vmatpush1.msra.mxu0 0.0
    %273 = vmatprep.subr.mxu0 0.0
    %274 = vmatpush1.msra.mxu0 0.0
    %275 = vmatprep.subr.mxu0 0.0
    %276 = vmatpush1.msra.mxu0 0.0
    %277 = vmatprep.subr.mxu0 0.0
    %278 = vmatpush1.msra.mxu0 0.0
    %279 = vmatprep.subr.mxu0 0.0
    %280 = vmatpush1.msra.mxu0 0.0
    %281 = vmatprep.subr.mxu0 0.0
    %282 = vmatpush1.msra.mxu0 0.0
    %283 = vmatprep.subr.mxu0 0.0
    %284 = vmatpush1.msra.mxu0 0.0
    %285 = vmatprep.subr.mxu0 0.0
    %286 = vmatpush1.msra.mxu0 0.0
    %287 = vmatprep.subr.mxu0 0.0
    %288 = vmatpush1.msra.mxu0 0.0
    %289 = vmatprep.subr.mxu0 0.0
    %290 = vmatpush1.msra.mxu0 0.0
    %291 = vmatprep.subr.mxu0 0.0
    %292 = vmatpush1.msra.mxu0 0.0
    %293 = vmatprep.subr.mxu0 0.0
    %294 = vmatpush1.msra.mxu0 0.0
    %295 = vmatprep.subr.mxu0 0.0
    %296 = vmatpush1.msra.mxu0 0.0
    %297 = vmatprep.mubr.f32.mxu0 0.0
    %298 = vmatmul.mubr.f32.gmra.mrb[0].mxu0 %v222
    %v299 = vpop.f32.mrb[0].mxu0
    %v300 = vadd.f32 0.0, %v299
    %v301 = vpop.f32.mrb[0].mxu0
    %302 = vmatprep.mubr.f32.mxu0 0.0
    %303 = vmatmul.mubr.f32.gmra.mrb[0].mxu0 %v225
    %v304 = vpop.f32.mrb[0].mxu0
    %v305 = vadd.f32 0.0, %v304
    %v306 = vpop.f32.mrb[0].mxu0
    %307 = vmatprep.mubr.f32.mxu0 0.0
    %308 = vmatmul.mubr.f32.gmra.mrb[0].mxu0 %v228
    %v309 = vpop.f32.mrb[0].mxu0
    %v310 = vadd.f32 0.0, %v309
    %v311 = vpop.f32.mrb[0].mxu0
    %312 = vmatprep.mubr.f32.mxu0 0.0
    %313 = vmatmul.mubr.f32.gmra.mrb[0].mxu0 %v231
    %v314 = vpop.f32.mrb[0].mxu0
    %v315 = vadd.f32 0.0, %v314
    %v316 = vpop.f32.mrb[0].mxu0
    %317 = vdwg.mxu0
    %v318 = vld [vmem:[#allocation10] sm:$0xff]
    %v319 = vld [vmem:[#allocation10 + $0x8] sm:$0xff]
    %v320 = vld [vmem:[#allocation10 + $0x10] sm:$0xff]
    %v321 = vld [vmem:[#allocation10 + $0x18] sm:$0xff]
    %v323 = vsel %vm220, %v318, 0
    %v326 = vsel %vm220, %v319, 0
    %v329 = vsel %vm220, %v320, 0
    %v332 = vsel %vm220, %v321, 0
    %334 = vmatprep.subr.mxu0 0.0
    %335 = vmatpush1.msra.mxu0 %v212
    %336 = vmatprep.subr.mxu0 0.0
    %337 = vmatpush1.msra.mxu0 %v213
    %338 = vmatprep.subr.mxu0 0.0
    %339 = vmatpush1.msra.mxu0 %v214
    %340 = vmatprep.subr.mxu0 0.0
    %341 = vmatpush1.msra.mxu0 %v215
    %342 = vmatprep.subr.mxu0 0.0
    %343 = vmatpush1.msra.mxu0 0.0
    %344 = vmatprep.subr.mxu0 0.0
    %345 = vmatpush1.msra.mxu0 0.0
    %346 = vmatprep.subr.mxu0 0.0
    %347 = vmatpush1.msra.mxu0 0.0
    %348 = vmatprep.subr.mxu0 0.0
    %349 = vmatpush1.msra.mxu0 0.0
    %350 = vmatprep.subr.mxu0 0.0
    %351 = vmatpush1.msra.mxu0 0.0
    %352 = vmatprep.subr.mxu0 0.0
    %353 = vmatpush1.msra.mxu0 0.0
    %354 = vmatprep.subr.mxu0 0.0
    %355 = vmatpush1.msra.mxu0 0.0
    %356 = vmatprep.subr.mxu0 0.0
    %357 = vmatpush1.msra.mxu0 0.0
    %358 = vmatprep.subr.mxu0 0.0
    %359 = vmatpush1.msra.mxu0 0.0
    %360 = vmatprep.subr.mxu0 0.0
    %361 = vmatpush1.msra.mxu0 0.0
    %362 = vmatprep.subr.mxu0 0.0
    %363 = vmatpush1.msra.mxu0 0.0
    %364 = vmatprep.subr.mxu0 0.0
    %365 = vmatpush1.msra.mxu0 0.0
    %366 = vmatprep.subr.mxu0 0.0
    %367 = vmatpush1.msra.mxu0 0.0
    %368 = vmatprep.subr.mxu0 0.0
    %369 = vmatpush1.msra.mxu0 0.0
    %370 = vmatprep.subr.mxu0 0.0
    %371 = vmatpush1.msra.mxu0 0.0
    %372 = vmatprep.subr.mxu0 0.0
    %373 = vmatpush1.msra.mxu0 0.0
    %374 = vmatprep.subr.mxu0 0.0
    %375 = vmatpush1.msra.mxu0 0.0
    %376 = vmatprep.subr.mxu0 0.0
    %377 = vmatpush1.msra.mxu0 0.0
    %378 = vmatprep.subr.mxu0 0.0
    %379 = vmatpush1.msra.mxu0 0.0
    %380 = vmatprep.subr.mxu0 0.0
    %381 = vmatpush1.msra.mxu0 0.0
    %382 = vmatprep.subr.mxu0 0.0
    %383 = vmatpush1.msra.mxu0 0.0
    %384 = vmatprep.subr.mxu0 0.0
    %385 = vmatpush1.msra.mxu0 0.0
    %386 = vmatprep.subr.mxu0 0.0
    %387 = vmatpush1.msra.mxu0 0.0
    %388 = vmatprep.subr.mxu0 0.0
    %389 = vmatpush1.msra.mxu0 0.0
    %390 = vmatprep.subr.mxu0 0.0
    %391 = vmatpush1.msra.mxu0 0.0
    %392 = vmatprep.subr.mxu0 0.0
    %393 = vmatpush1.msra.mxu0 0.0
    %394 = vmatprep.subr.mxu0 0.0
    %395 = vmatpush1.msra.mxu0 0.0
    %396 = vmatprep.subr.mxu0 0.0
    %397 = vmatpush1.msra.mxu0 0.0
    %398 = vmatprep.mubr.f32.mxu0 0.0
    %399 = vmatmul.mubr.f32.gmra.mrb[0].mxu0 %v323
    %v400 = vpop.f32.mrb[0].mxu0
    %v401 = vadd.f32 0.0, %v400
    %v402 = vpop.f32.mrb[0].mxu0
    %403 = vmatprep.mubr.f32.mxu0 0.0
    %404 = vmatmul.mubr.f32.gmra.mrb[0].mxu0 %v326
    %v405 = vpop.f32.mrb[0].mxu0
    %v406 = vadd.f32 0.0, %v405
    %v407 = vpop.f32.mrb[0].mxu0
    %408 = vmatprep.mubr.f32.mxu0 0.0
    %409 = vmatmul.mubr.f32.gmra.mrb[0].mxu0 %v329
    %v410 = vpop.f32.mrb[0].mxu0
    %v411 = vadd.f32 0.0, %v410
    %v412 = vpop.f32.mrb[0].mxu0
    %413 = vmatprep.mubr.f32.mxu0 0.0
    %414 = vmatmul.mubr.f32.gmra.mrb[0].mxu0 %v332
    %v415 = vpop.f32.mrb[0].mxu0
    %v416 = vadd.f32 0.0, %v415
    %v417 = vpop.f32.mrb[0].mxu0
    %418 = vdwg.mxu0
    %v419 = vld [vmem:[#allocation7] sm:$0xff]
    %v420 = vld [vmem:[#allocation7 + $0x8] sm:$0xff]
    %v421 = vld [vmem:[#allocation7 + $0x10] sm:$0xff]
    %v422 = vld [vmem:[#allocation7 + $0x18] sm:$0xff]
    %v423 = vld [vmem:[#allocation7 + $0x20] sm:$0xff]
    %v424 = vld [vmem:[#allocation7 + $0x28] sm:$0xff]
    %v425 = vld [vmem:[#allocation7 + $0x30] sm:$0xff]
    %v426 = vld [vmem:[#allocation7 + $0x38] sm:$0xff]
    %v427 = vld [vmem:[#allocation7 + $0x40] sm:$0xff]
    %v428 = vld [vmem:[#allocation7 + $0x48] sm:$0xff]
    %v429 = vld [vmem:[#allocation7 + $0x50] sm:$0xff]
    %v430 = vld [vmem:[#allocation7 + $0x58] sm:$0xff]
    %v431 = vld [vmem:[#allocation7 + $0x60] sm:$0xff]
    %v432 = vld [vmem:[#allocation7 + $0x68] sm:$0xff]
    %v433 = vld [vmem:[#allocation7 + $0x70] sm:$0xff]
    %v434 = vld [vmem:[#allocation7 + $0x78] sm:$0xff]
    %v435 = vld [vmem:[#allocation7 + $0x80] sm:$0xff]
    %v436 = vld [vmem:[#allocation7 + $0x88] sm:$0xff]
    %v437 = vld [vmem:[#allocation7 + $0x90] sm:$0xff]
    %v438 = vld [vmem:[#allocation7 + $0x98] sm:$0xff]
    %v439 = vld [vmem:[#allocation7 + $0xa0] sm:$0xff]
    %v440 = vld [vmem:[#allocation7 + $0xa8] sm:$0xff]
    %v441 = vld [vmem:[#allocation7 + $0xb0] sm:$0xff]
    %v442 = vld [vmem:[#allocation7 + $0xb8] sm:$0xff]
    %v443 = vld [vmem:[#allocation7 + $0xc0] sm:$0xff]
    %v444 = vld [vmem:[#allocation7 + $0xc8] sm:$0xff]
    %v445 = vld [vmem:[#allocation7 + $0xd0] sm:$0xff]
    %v446 = vld [vmem:[#allocation7 + $0xd8] sm:$0xff]
    %v447 = vld [vmem:[#allocation7 + $0xe0] sm:$0xff]
    %v448 = vld [vmem:[#allocation7 + $0xe8] sm:$0xff]
    %v449 = vld [vmem:[#allocation7 + $0xf0] sm:$0xff]
    %v450 = vld [vmem:[#allocation7 + $0xf8] sm:$0xff]
    %451 = vmatprep.subr.mxu0 0.0
    %452 = vmatpush1.msra.mxu0 %v435
    %453 = vmatprep.subr.mxu0 0.0
    %454 = vmatpush1.msra.mxu0 %v436
    %455 = vmatprep.subr.mxu0 0.0
    %456 = vmatpush1.msra.mxu0 %v437
    %457 = vmatprep.subr.mxu0 0.0
    %458 = vmatpush1.msra.mxu0 %v438
    %459 = vmatprep.subr.mxu0 0.0
    %460 = vmatpush1.msra.mxu0 %v439
    %461 = vmatprep.subr.mxu0 0.0
    %462 = vmatpush1.msra.mxu0 %v440
    %463 = vmatprep.subr.mxu0 0.0
    %464 = vmatpush1.msra.mxu0 %v441
    %465 = vmatprep.subr.mxu0 0.0
    %466 = vmatpush1.msra.mxu0 %v442
    %467 = vmatprep.subr.mxu0 0.0
    %468 = vmatpush1.msra.mxu0 %v443
    %469 = vmatprep.subr.mxu0 0.0
    %470 = vmatpush1.msra.mxu0 %v444
    %471 = vmatprep.subr.mxu0 0.0
    %472 = vmatpush1.msra.mxu0 %v445
    %473 = vmatprep.subr.mxu0 0.0
    %474 = vmatpush1.msra.mxu0 %v446
    %475 = vmatprep.subr.mxu0 0.0
    %476 = vmatpush1.msra.mxu0 %v447
    %477 = vmatprep.subr.mxu0 0.0
    %478 = vmatpush1.msra.mxu0 %v448
    %479 = vmatprep.subr.mxu0 0.0
    %480 = vmatpush1.msra.mxu0 %v449
    %481 = vmatprep.subr.mxu0 0.0
    %482 = vmatpush1.msra.mxu0 %v450
    %483 = vmatprep.subr.mxu0 0.0
    %484 = vmatpush1.msra.mxu0 0.0
    %485 = vmatprep.subr.mxu0 0.0
    %486 = vmatpush1.msra.mxu0 0.0
    %487 = vmatprep.subr.mxu0 0.0
    %488 = vmatpush1.msra.mxu0 0.0
    %489 = vmatprep.subr.mxu0 0.0
    %490 = vmatpush1.msra.mxu0 0.0
    %491 = vmatprep.subr.mxu0 0.0
    %492 = vmatpush1.msra.mxu0 0.0
    %493 = vmatprep.subr.mxu0 0.0
    %494 = vmatpush1.msra.mxu0 0.0
    %495 = vmatprep.subr.mxu0 0.0
    %496 = vmatpush1.msra.mxu0 0.0
    %497 = vmatprep.subr.mxu0 0.0
    %498 = vmatpush1.msra.mxu0 0.0
    %499 = vmatprep.subr.mxu0 0.0
    %500 = vmatpush1.msra.mxu0 0.0
    %501 = vmatprep.subr.mxu0 0.0
    %502 = vmatpush1.msra.mxu0 0.0
    %503 = vmatprep.subr.mxu0 0.0
    %504 = vmatpush1.msra.mxu0 0.0
    %505 = vmatprep.subr.mxu0 0.0
    %506 = vmatpush1.msra.mxu0 0.0
    %507 = vmatprep.subr.mxu0 0.0
    %508 = vmatpush1.msra.mxu0 0.0
    %509 = vmatprep.subr.mxu0 0.0
    %510 = vmatpush1.msra.mxu0 0.0
    %511 = vmatprep.subr.mxu0 0.0
    %512 = vmatpush1.msra.mxu0 0.0
    %513 = vmatprep.subr.mxu0 0.0
    %514 = vmatpush1.msra.mxu0 0.0
    %515 = vmatprep.mubr.f32.mxu0 0.0
    %516 = vmatmul.mubr.f32.gmra.mrb[0].mxu0 %v212
    %v517 = vpop.f32.mrb[0].mxu0
    %v518 = vadd.f32 0.0, %v517
    %v519 = vpop.f32.mrb[0].mxu0
    %520 = vmatprep.mubr.f32.mxu0 0.0
    %521 = vmatmul.mubr.f32.gmra.mrb[0].mxu0 %v213
    %v522 = vpop.f32.mrb[0].mxu0
    %v523 = vadd.f32 0.0, %v522
    %v524 = vpop.f32.mrb[0].mxu0
    %525 = vmatprep.mubr.f32.mxu0 0.0
    %526 = vmatmul.mubr.f32.gmra.mrb[0].mxu0 %v214
    %v527 = vpop.f32.mrb[0].mxu0
    %v528 = vadd.f32 0.0, %v527
    %v529 = vpop.f32.mrb[0].mxu0
    %530 = vmatprep.mubr.f32.mxu0 0.0
    %531 = vmatmul.mubr.f32.gmra.mrb[0].mxu0 %v215
    %v532 = vpop.f32.mrb[0].mxu0
    %v533 = vadd.f32 0.0, %v532
    %v534 = vpop.f32.mrb[0].mxu0
    %535 = vdwg.mxu0
    %536 = vmatprep.subr.mxu0 0.0
    %537 = vmatpush1.msra.mxu0 %v419
    %538 = vmatprep.subr.mxu0 0.0
    %539 = vmatpush1.msra.mxu0 %v420
    %540 = vmatprep.subr.mxu0 0.0
    %541 = vmatpush1.msra.mxu0 %v421
    %542 = vmatprep.subr.mxu0 0.0
    %543 = vmatpush1.msra.mxu0 %v422
    %544 = vmatprep.subr.mxu0 0.0
    %545 = vmatpush1.msra.mxu0 %v423
    %546 = vmatprep.subr.mxu0 0.0
    %547 = vmatpush1.msra.mxu0 %v424
    %548 = vmatprep.subr.mxu0 0.0
    %549 = vmatpush1.msra.mxu0 %v425
    %550 = vmatprep.subr.mxu0 0.0
    %551 = vmatpush1.msra.mxu0 %v426
    %552 = vmatprep.subr.mxu0 0.0
    %553 = vmatpush1.msra.mxu0 %v427
    %554 = vmatprep.subr.mxu0 0.0
    %555 = vmatpush1.msra.mxu0 %v428
    %556 = vmatprep.subr.mxu0 0.0
    %557 = vmatpush1.msra.mxu0 %v429
    %558 = vmatprep.subr.mxu0 0.0
    %559 = vmatpush1.msra.mxu0 %v430
    %560 = vmatprep.subr.mxu0 0.0
    %561 = vmatpush1.msra.mxu0 %v431
    %562 = vmatprep.subr.mxu0 0.0
    %563 = vmatpush1.msra.mxu0 %v432
    %564 = vmatprep.subr.mxu0 0.0
    %565 = vmatpush1.msra.mxu0 %v433
    %566 = vmatprep.subr.mxu0 0.0
    %567 = vmatpush1.msra.mxu0 %v434
    %568 = vmatprep.subr.mxu0 0.0
    %569 = vmatpush1.msra.mxu0 0.0
    %570 = vmatprep.subr.mxu0 0.0
    %571 = vmatpush1.msra.mxu0 0.0
    %572 = vmatprep.subr.mxu0 0.0
    %573 = vmatpush1.msra.mxu0 0.0
    %574 = vmatprep.subr.mxu0 0.0
    %575 = vmatpush1.msra.mxu0 0.0
    %576 = vmatprep.subr.mxu0 0.0
    %577 = vmatpush1.msra.mxu0 0.0
    %578 = vmatprep.subr.mxu0 0.0
    %579 = vmatpush1.msra.mxu0 0.0
    %580 = vmatprep.subr.mxu0 0.0
    %581 = vmatpush1.msra.mxu0 0.0
    %582 = vmatprep.subr.mxu0 0.0
    %583 = vmatpush1.msra.mxu0 0.0
    %584 = vmatprep.subr.mxu0 0.0
    %585 = vmatpush1.msra.mxu0 0.0
    %586 = vmatprep.subr.mxu0 0.0
    %587 = vmatpush1.msra.mxu0 0.0
    %588 = vmatprep.subr.mxu0 0.0
    %589 = vmatpush1.msra.mxu0 0.0
    %590 = vmatprep.subr.mxu0 0.0
    %591 = vmatpush1.msra.mxu0 0.0
    %592 = vmatprep.subr.mxu0 0.0
    %593 = vmatpush1.msra.mxu0 0.0
    %594 = vmatprep.subr.mxu0 0.0
    %595 = vmatpush1.msra.mxu0 0.0
    %596 = vmatprep.subr.mxu0 0.0
    %597 = vmatpush1.msra.mxu0 0.0
    %598 = vmatprep.subr.mxu0 0.0
    %599 = vmatpush1.msra.mxu0 0.0
    %600 = vmatprep.mubr.f32.mxu0 0.0
    %601 = vmatmul.mubr.f32.gmra.mrb[0].mxu0 %v300
    %v602 = vpop.f32.mrb[0].mxu0
    %v603 = vadd.f32 %v518, %v602
    %v604 = vpop.f32.mrb[0].mxu0
    %605 = vmatprep.mubr.f32.mxu0 0.0
    %606 = vmatmul.mubr.f32.gmra.mrb[0].mxu0 %v305
    %v607 = vpop.f32.mrb[0].mxu0
    %v608 = vadd.f32 %v523, %v607
    %v609 = vpop.f32.mrb[0].mxu0
    %610 = vmatprep.mubr.f32.mxu0 0.0
    %611 = vmatmul.mubr.f32.gmra.mrb[0].mxu0 %v310
    %v612 = vpop.f32.mrb[0].mxu0
    %v613 = vadd.f32 %v528, %v612
    %v614 = vpop.f32.mrb[0].mxu0
    %615 = vmatprep.mubr.f32.mxu0 0.0
    %616 = vmatmul.mubr.f32.gmra.mrb[0].mxu0 %v315
    %v617 = vpop.f32.mrb[0].mxu0
    %v618 = vadd.f32 %v533, %v617
    %v619 = vpop.f32.mrb[0].mxu0
    %620 = vdwg.mxu0
    %v621 = vld [vmem:[#allocation7 + $0x100] sm:$0xff]
    %v622 = vld [vmem:[#allocation7 + $0x108] sm:$0xff]
    %v623 = vld [vmem:[#allocation7 + $0x110] sm:$0xff]
    %v624 = vld [vmem:[#allocation7 + $0x118] sm:$0xff]
    %v625 = vld [vmem:[#allocation7 + $0x120] sm:$0xff]
    %v626 = vld [vmem:[#allocation7 + $0x128] sm:$0xff]
    %v627 = vld [vmem:[#allocation7 + $0x130] sm:$0xff]
    %v628 = vld [vmem:[#allocation7 + $0x138] sm:$0xff]
    %v629 = vld [vmem:[#allocation7 + $0x140] sm:$0xff]
    %v630 = vld [vmem:[#allocation7 + $0x148] sm:$0xff]
    %v631 = vld [vmem:[#allocation7 + $0x150] sm:$0xff]
    %v632 = vld [vmem:[#allocation7 + $0x158] sm:$0xff]
    %v633 = vld [vmem:[#allocation7 + $0x160] sm:$0xff]
    %v634 = vld [vmem:[#allocation7 + $0x168] sm:$0xff]
    %v635 = vld [vmem:[#allocation7 + $0x170] sm:$0xff]
    %v636 = vld [vmem:[#allocation7 + $0x178] sm:$0xff]
    %637 = vmatprep.subr.mxu0 0.0
    %638 = vmatpush1.msra.mxu0 %v621
    %639 = vmatprep.subr.mxu0 0.0
    %640 = vmatpush1.msra.mxu0 %v622
    %641 = vmatprep.subr.mxu0 0.0
    %642 = vmatpush1.msra.mxu0 %v623
    %643 = vmatprep.subr.mxu0 0.0
    %644 = vmatpush1.msra.mxu0 %v624
    %645 = vmatprep.subr.mxu0 0.0
    %646 = vmatpush1.msra.mxu0 %v625
    %647 = vmatprep.subr.mxu0 0.0
    %648 = vmatpush1.msra.mxu0 %v626
    %649 = vmatprep.subr.mxu0 0.0
    %650 = vmatpush1.msra.mxu0 %v627
    %651 = vmatprep.subr.mxu0 0.0
    %652 = vmatpush1.msra.mxu0 %v628
    %653 = vmatprep.subr.mxu0 0.0
    %654 = vmatpush1.msra.mxu0 %v629
    %655 = vmatprep.subr.mxu0 0.0
    %656 = vmatpush1.msra.mxu0 %v630
    %657 = vmatprep.subr.mxu0 0.0
    %658 = vmatpush1.msra.mxu0 %v631
    %659 = vmatprep.subr.mxu0 0.0
    %660 = vmatpush1.msra.mxu0 %v632
    %661 = vmatprep.subr.mxu0 0.0
    %662 = vmatpush1.msra.mxu0 %v633
    %663 = vmatprep.subr.mxu0 0.0
    %664 = vmatpush1.msra.mxu0 %v634
    %665 = vmatprep.subr.mxu0 0.0
    %666 = vmatpush1.msra.mxu0 %v635
    %667 = vmatprep.subr.mxu0 0.0
    %668 = vmatpush1.msra.mxu0 %v636
    %669 = vmatprep.subr.mxu0 0.0
    %670 = vmatpush1.msra.mxu0 0.0
    %671 = vmatprep.subr.mxu0 0.0
    %672 = vmatpush1.msra.mxu0 0.0
    %673 = vmatprep.subr.mxu0 0.0
    %674 = vmatpush1.msra.mxu0 0.0
    %675 = vmatprep.subr.mxu0 0.0
    %676 = vmatpush1.msra.mxu0 0.0
    %677 = vmatprep.subr.mxu0 0.0
    %678 = vmatpush1.msra.mxu0 0.0
    %679 = vmatprep.subr.mxu0 0.0
    %680 = vmatpush1.msra.mxu0 0.0
    %681 = vmatprep.subr.mxu0 0.0
    %682 = vmatpush1.msra.mxu0 0.0
    %683 = vmatprep.subr.mxu0 0.0
    %684 = vmatpush1.msra.mxu0 0.0
    %685 = vmatprep.subr.mxu0 0.0
    %686 = vmatpush1.msra.mxu0 0.0
    %687 = vmatprep.subr.mxu0 0.0
    %688 = vmatpush1.msra.mxu0 0.0
    %689 = vmatprep.subr.mxu0 0.0
    %690 = vmatpush1.msra.mxu0 0.0
    %691 = vmatprep.subr.mxu0 0.0
    %692 = vmatpush1.msra.mxu0 0.0
    %693 = vmatprep.subr.mxu0 0.0
    %694 = vmatpush1.msra.mxu0 0.0
    %695 = vmatprep.subr.mxu0 0.0
    %696 = vmatpush1.msra.mxu0 0.0
    %697 = vmatprep.subr.mxu0 0.0
    %698 = vmatpush1.msra.mxu0 0.0
    %699 = vmatprep.subr.mxu0 0.0
    %700 = vmatpush1.msra.mxu0 0.0
    %701 = vmatprep.mubr.f32.mxu0 0.0
    %702 = vmatmul.mubr.f32.gmra.mrb[0].mxu0 %v401
    %v703 = vpop.f32.mrb[0].mxu0
    %v704 = vadd.f32 0.0, %v703
    %v705 = vpop.f32.mrb[0].mxu0
    %706 = vmatprep.mubr.f32.mxu0 0.0
    %707 = vmatmul.mubr.f32.gmra.mrb[0].mxu0 %v406
    %v708 = vpop.f32.mrb[0].mxu0
    %v709 = vadd.f32 0.0, %v708
    %v710 = vpop.f32.mrb[0].mxu0
    %711 = vmatprep.mubr.f32.mxu0 0.0
    %712 = vmatmul.mubr.f32.gmra.mrb[0].mxu0 %v411
    %v713 = vpop.f32.mrb[0].mxu0
    %v714 = vadd.f32 0.0, %v713
    %v715 = vpop.f32.mrb[0].mxu0
    %716 = vmatprep.mubr.f32.mxu0 0.0
    %717 = vmatmul.mubr.f32.gmra.mrb[0].mxu0 %v416
    %v718 = vpop.f32.mrb[0].mxu0
    %v719 = vadd.f32 0.0, %v718
    %v720 = vpop.f32.mrb[0].mxu0
    %721 = vdwg.mxu0
    %v722 = vadd.f32 %v603, %v704
    %v723 = vadd.f32 %v608, %v709
    %v724 = vadd.f32 %v613, %v714
    %v725 = vadd.f32 %v618, %v719
    %v726 = vld [vmem:[%s4] sm:$0x1]
    %v728 = vlaneseq
    %v729 = vshrl.u32 %v728, 7
    %v730 = vsub.s32 0, %v729
    %v731 = vrot.slane %v726, %v730
    %v733 = vadd.f32 %v722, %v731
    %v734 = vadd.f32 %v723, %v731
    %v735 = vadd.f32 %v724, %v731
    %v736 = vadd.f32 %v725, %v731
    %v737 = vmax.f32 %v733, 0.0
    %v738 = vmax.f32 %v734, 0.0
    %v739 = vmax.f32 %v735, 0.0
    %v740 = vmax.f32 %v736, 0.0
    %741 = vst [vmem:[#allocation11] sm:$0xff] %v737
    %742 = vst [vmem:[#allocation11 + $0x8] sm:$0xff] %v738
    %743 = vst [vmem:[#allocation11 + $0x10] sm:$0xff] %v739
    %744 = vst [vmem:[#allocation11 + $0x18] sm:$0xff] %v740
    // Predicated region
    $region50: #{tpu_custom_call.1} parent=1 // pred_check
      _
    $region51: #{tpu_custom_call.1} parent=1 // pred_check_branch
      %746 = sbr.rel (0) target = $region53
    $region52: #{tpu_custom_call.1} parent=1 // pred_region
      %s748 = ssub.s32 512, 512
      %749 = vsyncadd [#allocation4], %s748
      %s750 = sshll.u32 [#allocation11], 4
      %s751 = int_to_ptr.vmem [resolvable:$true] %s750
      %756 = dma.vmem_to_hbm [thread:$0]  %s751, 512, %s7, [#allocation4], 128, 128, 8
    $region53: #{tpu_custom_call.1} parent=1 // pred_fallthru
      _
    // Predicated region
    $region54: #{tpu_custom_call.1} parent=1 // pred_check
      _
    $region55: #{tpu_custom_call.1} parent=1 // pred_check_branch
      %758 = sbr.rel (0) target = $region57
    $region56: #{tpu_custom_call.1} parent=1 // pred_region
      %759 = dma.done [#allocation4], 512
    $region57: #{tpu_custom_call.1} parent=1 // pred_fallthru
      _
    %760 = vsyncpa [#allocation3], 1
    %761 = vsyncpa [#allocation6], 1
    %762 = vsyncpa [#allocation9], 1
    %763 = vsyncpa [#allocation4], 1

</llo_original>
